<compile_context>
chip_gen: v7x
topology: tpu7x:2x2x1
jax: 0.10.0
libtpu: 0.0.40
codegen_flags: <defaults>
</compile_context>

<pallas_src>
import jax
import jax.numpy as jnp
from jax.experimental import pallas as pl
from jax.experimental.pallas import tpu as pltpu  # noqa: F401 (TPU backend assumed)

# ----------------------------- problem constants -----------------------------
N = 4                      # nodes per graph
IN_CH = 1                  # in_channels
HID_CH = 32                # hidden_channels
OUT_CH = 8                 # out_channels

N_PAD = 8                  # per-graph node rows padded to one sublane group
B = 8                      # graphs processed per call
BN = B * N_PAD             # 64 flattened node rows
HID_PAD = 32               # == HID_CH
OUT_PAD = 128              # lane-dense output / params width

# merged params buffer row layout (single constant DMA)
PR_W1 = 0                  # row 0, lanes [0:HID_PAD) : W1 (1, 32)
PR_B1 = 1                  # row 1, lanes [0:HID_PAD) : b1
PR_B2 = 2                  # row 2, lanes [0:OUT_PAD) : b2
PR_W2 = 8                  # rows [8:8+HID_PAD)       : W2 (32, 128), 8-aligned
P_ROWS = PR_W2 + HID_PAD   # 40


# --------------------------------- kernel ------------------------------------
def gcn_kernel(a_ref, x_ref, p_ref, o_ref):
    # a_ref: (BN, BN)       block-diagonal normalized adjacency (padded rows/cols zero)
    # x_ref: (BN, 1)        flattened node features (padded rows zero)
    # p_ref: (P_ROWS, OUT_PAD)  merged params (W1, b1, b2, W2)
    # o_ref: (BN, OUT_PAD)
    a = a_ref[...]

    w1_row = p_ref[PR_W1:PR_W1 + 1, 0:HID_PAD]        # (1, HID_PAD)
    b1 = p_ref[PR_B1:PR_B1 + 1, 0:HID_PAD]            # (1, HID_PAD)
    b2 = p_ref[PR_B2:PR_B2 + 1, :]                    # (1, OUT_PAD)
    w2 = p_ref[PR_W2:PR_W2 + HID_PAD, :]              # (HID_PAD, OUT_PAD)

    # Layer 1: X @ W1 with in_channels == 1 is a rank-1 outer product -> VPU only.
    xw = x_ref[...] * w1_row                          # (BN, HID_PAD)
    h = jnp.dot(a, xw, preferred_element_type=jnp.float32) + b1
    h = jnp.maximum(h, 0.0)

    # Layer 2: GCNConv over the whole flattened batch (M = BN = 64).
    hw = jnp.dot(h, w2, preferred_element_type=jnp.float32)          # (BN, OUT_PAD)
    o_ref[...] = jnp.dot(a, hw, preferred_element_type=jnp.float32) + b2


def gcn_forward(a_bd, x_flat, params):
    """Single-step forward over the whole batch.  Gridless call: every operand
    is a whole-array VMEM block, DMA'd exactly once; output is one lane-dense
    (BN, OUT_PAD) slab."""
    bn = x_flat.shape[0]
    return pl.pallas_call(
        gcn_kernel,
        out_shape=jax.ShapeDtypeStruct((bn, OUT_PAD), jnp.float32),
    )(a_bd, x_flat, params)


# ------------------------------- JAX glue -------------------------------------
def build_normalized_adjacency(edge_index, n):
    """Dense D^{-1/2}(A+I)D^{-1/2}, matching PyG gcn_norm with add_self_loops."""
    src, dst = edge_index
    A = jnp.zeros((n, n), jnp.float32).at[dst, src].add(1.0)
    A = A + jnp.eye(n, dtype=jnp.float32)
    deg = A.sum(axis=1)
    dinv = jnp.where(deg > 0, 1.0 / jnp.sqrt(deg), 0.0)
    return dinv[:, None] * A * dinv[None, :]


def glorot(key, shape):
    fan_in, fan_out = shape
    limit = jnp.sqrt(6.0 / (fan_in + fan_out))
    return jax.random.uniform(key, shape, jnp.float32, -limit, limit)


if __name__ == "__main__":
    # ---- inputs from the reference module (deterministic) ----
    edge_index = jnp.array(
        [[0, 1, 1, 2, 2, 3, 3, 0],
         [1, 0, 2, 1, 3, 2, 0, 3]], dtype=jnp.int32)
    node_features = jnp.array([[1.0], [2.0], [3.0], [4.0]], dtype=jnp.float32)

    # ---- deterministic parameter init (GCNConv weight/bias shapes) ----
    key = jax.random.PRNGKey(0)
    k1, k2, k3 = jax.random.split(key, 3)
    w1 = glorot(k1, (IN_CH, HID_CH))                 # (1, 32)
    b1 = jnp.zeros((HID_CH,), jnp.float32)
    w2 = glorot(k2, (HID_CH, OUT_CH))                # (32, 8)
    b2 = jnp.zeros((OUT_CH,), jnp.float32)

    # ---- static-graph preprocessing, hoisted out of the per-call path ----
    a_hat = build_normalized_adjacency(edge_index, N)                  # (4, 4)
    a_pad = jnp.zeros((N_PAD, N_PAD), jnp.float32).at[:N, :N].set(a_hat)
    a_bd = jnp.kron(jnp.eye(B, dtype=jnp.float32), a_pad)              # (64, 64) block-diag

    # batch of graphs: graph 0 is the module's fixed graph; the rest share the
    # same topology with different node features (demonstrates batching).
    extra_feats = jax.random.normal(k3, (B - 1, N, IN_CH), jnp.float32)
    feats = jnp.concatenate([node_features[None], extra_feats], axis=0)  # (B, 4, 1)
    x_flat = (jnp.zeros((B, N_PAD, IN_CH), jnp.float32)
              .at[:, :N, :].set(feats)
              .reshape(BN, IN_CH))                                       # (64, 1)

    # ---- one merged, pre-padded params buffer (single constant DMA) ----
    params = jnp.zeros((P_ROWS, OUT_PAD), jnp.float32)
    params = params.at[PR_W1, :HID_CH].set(w1[0])
    params = params.at[PR_B1, :HID_CH].set(b1)
    params = params.at[PR_B2, :OUT_CH].set(b2)
    params = params.at[PR_W2:PR_W2 + HID_CH, :OUT_CH].set(w2)

    fwd = jax.jit(gcn_forward)
    out_padded = jax.block_until_ready(fwd(a_bd, x_flat, params))       # (64, 128)
    out = out_padded.reshape(B, N_PAD, OUT_PAD)[:, :N, :OUT_CH]         # (B, 4, 8)

    # ---- reference check in plain JAX ----
    def ref_fwd(xb):
        h = jnp.maximum(a_hat @ (xb @ w1) + b1, 0.0)
        return a_hat @ (h @ w2) + b2

    ref = jax.vmap(ref_fwd)(feats)                                      # (B, 4, 8)
    assert jnp.allclose(out, ref, atol=1e-5), "mismatch vs. reference"
    # graph 0 is exactly the module's fixed input graph
    assert jnp.allclose(out[0], ref_fwd(node_features), atol=1e-5)

    print("KERNEL_OK")
</pallas_src>

<mosaic_0001>
module attributes {stable_mosaic.version = 11 : i64} {
  func.func @gcn_kernel(%arg0: memref<64x64xf32, #tpu.memory_space<vmem>>, %arg1: memref<64x1xf32, #tpu.memory_space<vmem>>, %arg2: memref<40x128xf32, #tpu.memory_space<vmem>>, %arg3: memref<64x128xf32, #tpu.memory_space<vmem>>) attributes {dimension_semantics = [], scalar_prefetch = 0 : i64, scratch_operands = 0 : i64, tpu.core_type = #tpu.core_type<tc>} {
    %c0 = arith.constant 0 : index
    %c0_0 = arith.constant 0 : index
    %0 = vector.load %arg0[%c0, %c0_0] : memref<64x64xf32, #tpu.memory_space<vmem>>, vector<64x64xf32>
    %c0_1 = arith.constant 0 : index
    %c0_2 = arith.constant 0 : index
    %1 = vector.load %arg2[%c0_1, %c0_2] : memref<40x128xf32, #tpu.memory_space<vmem>>, vector<1x32xf32>
    %c1 = arith.constant 1 : index
    %c0_3 = arith.constant 0 : index
    %2 = vector.load %arg2[%c1, %c0_3] : memref<40x128xf32, #tpu.memory_space<vmem>>, vector<1x32xf32>
    %c2 = arith.constant 2 : index
    %c0_4 = arith.constant 0 : index
    %3 = vector.load %arg2[%c2, %c0_4] : memref<40x128xf32, #tpu.memory_space<vmem>>, vector<1x128xf32>
    %c8 = arith.constant 8 : index
    %c0_5 = arith.constant 0 : index
    %4 = vector.load %arg2[%c8, %c0_5] : memref<40x128xf32, #tpu.memory_space<vmem>>, vector<32x128xf32>
    %c0_6 = arith.constant 0 : index
    %c0_7 = arith.constant 0 : index
    %5 = vector.load %arg1[%c0_6, %c0_7] : memref<64x1xf32, #tpu.memory_space<vmem>>, vector<64x1xf32>
    %6 = vector.broadcast %5 : vector<64x1xf32> to vector<64x32xf32>
    %7 = vector.broadcast %1 : vector<1x32xf32> to vector<64x32xf32>
    %8 = arith.mulf %6, %7 : vector<64x32xf32>
    %cst = arith.constant dense<0.000000e+00> : vector<64x32xf32>
    %9 = tpu.matmul %0, %8, %cst {dimension_numbers = #tpu.dot_dimension_numbers<[1], [0], [0], [1], [0, 0, 1, 1], [], []>} : vector<64x64xf32>, vector<64x32xf32>, vector<64x32xf32> -> vector<64x32xf32>
    %10 = vector.broadcast %2 : vector<1x32xf32> to vector<64x32xf32>
    %11 = arith.addf %9, %10 : vector<64x32xf32>
    %cst_8 = arith.constant 0.000000e+00 : f32
    %12 = vector.broadcast %cst_8 : f32 to vector<64x32xf32>
    %13 = arith.maximumf %11, %12 : vector<64x32xf32>
    %cst_9 = arith.constant dense<0.000000e+00> : vector<64x128xf32>
    %14 = tpu.matmul %13, %4, %cst_9 {dimension_numbers = #tpu.dot_dimension_numbers<[1], [0], [0], [1], [0, 0, 1, 1], [], []>} : vector<64x32xf32>, vector<32x128xf32>, vector<64x128xf32> -> vector<64x128xf32>
    %cst_10 = arith.constant dense<0.000000e+00> : vector<64x128xf32>
    %15 = tpu.matmul %0, %14, %cst_10 {dimension_numbers = #tpu.dot_dimension_numbers<[1], [0], [0], [1], [0, 0, 1, 1], [], []>} : vector<64x64xf32>, vector<64x128xf32>, vector<64x128xf32> -> vector<64x128xf32>
    %16 = vector.broadcast %3 : vector<1x128xf32> to vector<64x128xf32>
    %17 = arith.addf %15, %16 : vector<64x128xf32>
    %c0_11 = arith.constant 0 : index
    %c0_12 = arith.constant 0 : index
    %18 = vector.load %arg3[%c0_11, %c0_12] : memref<64x128xf32, #tpu.memory_space<vmem>>, vector<64x128xf32>
    tpu.vector_store %arg3[%c0_11, %c0_12], %17 {strides = array<i32>} : memref<64x128xf32, #tpu.memory_space<vmem>>, vector<64x128xf32>,
    return
  }
}

</mosaic_0001>

<llo_original>
// kernel: gcn_forward.1
$region0: #{gcn_forward.1}
  #allocation0 [shape = 'u32[]', space=smem, size = 0x4, offset = 0x4, fixed_abs, tag = 'smem constant byte address 0x4 - core index']
  #allocation1 [shape = 'u32[144,128]{1,0:T(1,128)}', space=vmem, size = 0x12000, scoped, tag = 'internal scratch']
  %s0 = inlined_call_operand.vmem [shape: f32[64,64], index: 0, kind: input, shape index: {}]
  %s1 = inlined_call_operand.vmem [shape: f32[64,1], index: 1, kind: input, shape index: {}]
  %s2 = inlined_call_operand.hbm [shape: f32[40,128], index: 2, kind: input, shape index: {}]
  %s3 = inlined_call_operand.hbm [shape: f32[64,128], index: 3, kind: output, shape index: {}]
  %s4 = sld [smem:[#allocation0]]
  $region26: #{gcn_forward.1} parent=0
    _
  %s6 = ssub.s32 1, %s4
  %s7 = scalar_select 0, %s6, %s4
  $region1: #{gcn_forward.1} parent=0
    #allocation2 [shape = 'u8[20480]{0}', space=vmem, size = 0x5000, scoped, tag = 'input window, operand 2, single buffered']
    #allocation3 [shape = 's32[1]{0}', space=sflag, size = 0x4, scoped, tag = 'scoped memory for gcn_forward.1']
    #allocation4 [shape = 's32[1]{0}', space=sflag, size = 0x4, scoped, tag = 'scoped memory for gcn_forward.1']
    #allocation5 [shape = 'u8[32768]{0}', space=vmem, size = 0x8000, scoped, tag = 'output window, operand 0, single buffered']
    %8 = vsyncpa [#allocation3], 0
    %9 = vsyncpa [#allocation4], 0
    // Predicated region
    $region2: #{gcn_forward.1} parent=1 // pred_check
      _
    $region3: #{gcn_forward.1} parent=1 // pred_check_branch
      %11 = sbr.rel (0) target = $region5
    $region4: #{gcn_forward.1} parent=1 // pred_region
      _
    $region5: #{gcn_forward.1} parent=1 // pred_fallthru
      _
    // Predicated region
    $region6: #{gcn_forward.1} parent=1 // pred_check
      _
    $region7: #{gcn_forward.1} parent=1 // pred_check_branch
      %13 = sbr.rel (0) target = $region9
    $region8: #{gcn_forward.1} parent=1 // pred_region
      _
    $region9: #{gcn_forward.1} parent=1 // pred_fallthru
      _
    // Predicated region
    $region10: #{gcn_forward.1} parent=1 // pred_check
      _
    $region11: #{gcn_forward.1} parent=1 // pred_check_branch
      %15 = sbr.rel (0) target = $region13
    $region12: #{gcn_forward.1} parent=1 // pred_region
      %s17 = ssub.s32 640, 640
      %18 = vsyncadd [#allocation3], %s17
      %s19 = sshll.u32 [#allocation2], 4
      %s20 = int_to_ptr.vmem [resolvable:$true] %s19
      %25 = dma.hbm_to_vmem [thread:$0]  %s2, 640, %s20, [#allocation3], 128, 128, 8
    $region13: #{gcn_forward.1} parent=1 // pred_fallthru
      _
    // Predicated region
    $region14: #{gcn_forward.1} parent=1 // pred_check
      _
    $region15: #{gcn_forward.1} parent=1 // pred_check_branch
      %27 = sbr.rel (0) target = $region17
    $region16: #{gcn_forward.1} parent=1 // pred_region
      %28 = dma.done [#allocation3], 640
    $region17: #{gcn_forward.1} parent=1 // pred_fallthru
      _
    %v29 = vld [vmem:[%s0] sm:$0xff]
    %v30 = vld [vmem:[%s0 + $0x8] sm:$0xff]
    %v31 = vld [vmem:[%s0 + $0x10] sm:$0xff]
    %v32 = vld [vmem:[%s0 + $0x18] sm:$0xff]
    %v33 = vld [vmem:[%s0 + $0x20] sm:$0xff]
    %v34 = vld [vmem:[%s0 + $0x28] sm:$0xff]
    %v35 = vld [vmem:[%s0 + $0x30] sm:$0xff]
    %v36 = vld [vmem:[%s0 + $0x38] sm:$0xff]
    %v37 = vld [vmem:[#allocation2] sm:$0x1]
    %v38 = vld [vmem:[#allocation2 + $0x1] sm:$0x1]
    %v39 = vld [vmem:[#allocation2 + $0x2] sm:$0x1]
    %v40 = vld [vmem:[#allocation2 + $0x8] sm:$0xff]
    %v41 = vld [vmem:[#allocation2 + $0x10] sm:$0xff]
    %v42 = vld [vmem:[#allocation2 + $0x18] sm:$0xff]
    %v43 = vld [vmem:[#allocation2 + $0x20] sm:$0xff]
    %v44 = vld [vmem:[%s1] sm:$0xff]
    %v45 = vld [vmem:[%s1 + $0x8] sm:$0xff]
    %v46 = vld [vmem:[%s1 + $0x10] sm:$0xff]
    %v47 = vld [vmem:[%s1 + $0x18] sm:$0xff]
    %v48 = vld [vmem:[%s1 + $0x20] sm:$0xff]
    %v49 = vld [vmem:[%s1 + $0x28] sm:$0xff]
    %v50 = vld [vmem:[%s1 + $0x30] sm:$0xff]
    %v51 = vld [vmem:[%s1 + $0x38] sm:$0xff]
    %53 = vset.pattern.permute.xlu0 0
    %54 = vperm.xlu0 %53, %v44
    %v55 = vpop.permute.xlu0 %54
    %58 = vset.pattern.permute.xlu0 0
    %59 = vperm.xlu0 %58, %v45
    %v60 = vpop.permute.xlu0 %59
    %63 = vset.pattern.permute.xlu0 0
    %64 = vperm.xlu0 %63, %v46
    %v65 = vpop.permute.xlu0 %64
    %68 = vset.pattern.permute.xlu0 0
    %69 = vperm.xlu0 %68, %v47
    %v70 = vpop.permute.xlu0 %69
    %73 = vset.pattern.permute.xlu0 0
    %74 = vperm.xlu0 %73, %v48
    %v75 = vpop.permute.xlu0 %74
    %78 = vset.pattern.permute.xlu0 0
    %79 = vperm.xlu0 %78, %v49
    %v80 = vpop.permute.xlu0 %79
    %83 = vset.pattern.permute.xlu0 0
    %84 = vperm.xlu0 %83, %v50
    %v85 = vpop.permute.xlu0 %84
    %88 = vset.pattern.permute.xlu0 0
    %89 = vperm.xlu0 %88, %v51
    %v90 = vpop.permute.xlu0 %89
    %v92 = vlaneseq
    %v93 = vshrl.u32 %v92, 7
    %v94 = vsub.s32 0, %v93
    %v95 = vrot.slane %v37, %v94
    %v96 = vmul.f32 %v55, %v95
    %v97 = vmul.f32 %v60, %v95
    %v98 = vmul.f32 %v65, %v95
    %v99 = vmul.f32 %v70, %v95
    %v100 = vmul.f32 %v75, %v95
    %v101 = vmul.f32 %v80, %v95
    %v102 = vmul.f32 %v85, %v95
    %v103 = vmul.f32 %v90, %v95
    %v104 = vlaneseq
    %v105 = vshrl.u32 %v104, 7
    %v106 = vsub.s32 0, %v105
    %v107 = vrot.slane %v38, %v106
    %vm108 = vcmask 523264
    %v110 = vsel %vm108, %v29, 0
    %v113 = vsel %vm108, %v30, 0
    %v116 = vsel %vm108, %v31, 0
    %v119 = vsel %vm108, %v32, 0
    %v122 = vsel %vm108, %v33, 0
    %v125 = vsel %vm108, %v34, 0
    %v128 = vsel %vm108, %v35, 0
    %v131 = vsel %vm108, %v36, 0
    %133 = vmatprep.subr.mxu0 0.0
    %134 = vmatpush1.msra.mxu0 %v96
    %135 = vmatprep.subr.mxu0 0.0
    %136 = vmatpush1.msra.mxu0 %v97
    %137 = vmatprep.subr.mxu0 0.0
    %138 = vmatpush1.msra.mxu0 %v98
    %139 = vmatprep.subr.mxu0 0.0
    %140 = vmatpush1.msra.mxu0 %v99
    %141 = vmatprep.subr.mxu0 0.0
    %142 = vmatpush1.msra.mxu0 %v100
    %143 = vmatprep.subr.mxu0 0.0
    %144 = vmatpush1.msra.mxu0 %v101
    %145 = vmatprep.subr.mxu0 0.0
    %146 = vmatpush1.msra.mxu0 %v102
    %147 = vmatprep.subr.mxu0 0.0
    %148 = vmatpush1.msra.mxu0 %v103
    %149 = vmatprep.subr.mxu0 0.0
    %150 = vmatpush1.msra.mxu0 0.0
    %151 = vmatprep.subr.mxu0 0.0
    %152 = vmatpush1.msra.mxu0 0.0
    %153 = vmatprep.subr.mxu0 0.0
    %154 = vmatpush1.msra.mxu0 0.0
    %155 = vmatprep.subr.mxu0 0.0
    %156 = vmatpush1.msra.mxu0 0.0
    %157 = vmatprep.subr.mxu0 0.0
    %158 = vmatpush1.msra.mxu0 0.0
    %159 = vmatprep.subr.mxu0 0.0
    %160 = vmatpush1.msra.mxu0 0.0
    %161 = vmatprep.subr.mxu0 0.0
    %162 = vmatpush1.msra.mxu0 0.0
    %163 = vmatprep.subr.mxu0 0.0
    %164 = vmatpush1.msra.mxu0 0.0
    %165 = vmatprep.subr.mxu0 0.0
    %166 = vmatpush1.msra.mxu0 0.0
    %167 = vmatprep.subr.mxu0 0.0
    %168 = vmatpush1.msra.mxu0 0.0
    %169 = vmatprep.subr.mxu0 0.0
    %170 = vmatpush1.msra.mxu0 0.0
    %171 = vmatprep.subr.mxu0 0.0
    %172 = vmatpush1.msra.mxu0 0.0
    %173 = vmatprep.subr.mxu0 0.0
    %174 = vmatpush1.msra.mxu0 0.0
    %175 = vmatprep.subr.mxu0 0.0
    %176 = vmatpush1.msra.mxu0 0.0
    %177 = vmatprep.subr.mxu0 0.0
    %178 = vmatpush1.msra.mxu0 0.0
    %179 = vmatprep.subr.mxu0 0.0
    %180 = vmatpush1.msra.mxu0 0.0
    %181 = vmatprep.subr.mxu0 0.0
    %182 = vmatpush1.msra.mxu0 0.0
    %183 = vmatprep.subr.mxu0 0.0
    %184 = vmatpush1.msra.mxu0 0.0
    %185 = vmatprep.subr.mxu0 0.0
    %186 = vmatpush1.msra.mxu0 0.0
    %187 = vmatprep.subr.mxu0 0.0
    %188 = vmatpush1.msra.mxu0 0.0
    %189 = vmatprep.subr.mxu0 0.0
    %190 = vmatpush1.msra.mxu0 0.0
    %191 = vmatprep.subr.mxu0 0.0
    %192 = vmatpush1.msra.mxu0 0.0
    %193 = vmatprep.subr.mxu0 0.0
    %194 = vmatpush1.msra.mxu0 0.0
    %195 = vmatprep.subr.mxu0 0.0
    %196 = vmatpush1.msra.mxu0 0.0
    %197 = vmatprep.mubr.f32.mxu0 0.0
    %198 = vmatmul.mubr.f32.gmra.mrb[0].mxu0 %v110
    %v199 = vpop.f32.mrb[0].mxu0
    %v200 = vadd.f32 %v107, %v199
    %v201 = vpop.f32.mrb[0].mxu0
    %202 = vmatprep.mubr.f32.mxu0 0.0
    %203 = vmatmul.mubr.f32.gmra.mrb[0].mxu0 %v113
    %v204 = vpop.f32.mrb[0].mxu0
    %v205 = vadd.f32 %v107, %v204
    %v206 = vpop.f32.mrb[0].mxu0
    %207 = vmatprep.mubr.f32.mxu0 0.0
    %208 = vmatmul.mubr.f32.gmra.mrb[0].mxu0 %v116
    %v209 = vpop.f32.mrb[0].mxu0
    %v210 = vadd.f32 %v107, %v209
    %v211 = vpop.f32.mrb[0].mxu0
    %212 = vmatprep.mubr.f32.mxu0 0.0
    %213 = vmatmul.mubr.f32.gmra.mrb[0].mxu0 %v119
    %v214 = vpop.f32.mrb[0].mxu0
    %v215 = vadd.f32 %v107, %v214
    %v216 = vpop.f32.mrb[0].mxu0
    %217 = vmatprep.mubr.f32.mxu0 0.0
    %218 = vmatmul.mubr.f32.gmra.mrb[0].mxu0 %v122
    %v219 = vpop.f32.mrb[0].mxu0
    %v220 = vadd.f32 %v107, %v219
    %v221 = vpop.f32.mrb[0].mxu0
    %222 = vmatprep.mubr.f32.mxu0 0.0
    %223 = vmatmul.mubr.f32.gmra.mrb[0].mxu0 %v125
    %v224 = vpop.f32.mrb[0].mxu0
    %v225 = vadd.f32 %v107, %v224
    %v226 = vpop.f32.mrb[0].mxu0
    %227 = vmatprep.mubr.f32.mxu0 0.0
    %228 = vmatmul.mubr.f32.gmra.mrb[0].mxu0 %v128
    %v229 = vpop.f32.mrb[0].mxu0
    %v230 = vadd.f32 %v107, %v229
    %v231 = vpop.f32.mrb[0].mxu0
    %232 = vmatprep.mubr.f32.mxu0 0.0
    %233 = vmatmul.mubr.f32.gmra.mrb[0].mxu0 %v131
    %v234 = vpop.f32.mrb[0].mxu0
    %v235 = vadd.f32 %v107, %v234
    %v236 = vpop.f32.mrb[0].mxu0
    %237 = vdwg.mxu0
    %v238 = vmax.f32 %v200, 0.0
    %v239 = vmax.f32 %v205, 0.0
    %v240 = vmax.f32 %v210, 0.0
    %v241 = vmax.f32 %v215, 0.0
    %v242 = vmax.f32 %v220, 0.0
    %v243 = vmax.f32 %v225, 0.0
    %v244 = vmax.f32 %v230, 0.0
    %v245 = vmax.f32 %v235, 0.0
    %vm246 = vcmask 261120
    %v248 = vsel %vm246, %v238, 0
    %v251 = vsel %vm246, %v239, 0
    %v254 = vsel %vm246, %v240, 0
    %v257 = vsel %vm246, %v241, 0
    %v260 = vsel %vm246, %v242, 0
    %v263 = vsel %vm246, %v243, 0
    %v266 = vsel %vm246, %v244, 0
    %v269 = vsel %vm246, %v245, 0
    %271 = vmatprep.subr.mxu0 0.0
    %272 = vmatpush1.msra.mxu0 %v40
    %273 = vmatprep.subr.mxu0 0.0
    %274 = vmatpush1.msra.mxu0 %v41
    %275 = vmatprep.subr.mxu0 0.0
    %276 = vmatpush1.msra.mxu0 %v42
    %277 = vmatprep.subr.mxu0 0.0
    %278 = vmatpush1.msra.mxu0 %v43
    %279 = vmatprep.subr.mxu0 0.0
    %280 = vmatpush1.msra.mxu0 0.0
    %281 = vmatprep.subr.mxu0 0.0
    %282 = vmatpush1.msra.mxu0 0.0
    %283 = vmatprep.subr.mxu0 0.0
    %284 = vmatpush1.msra.mxu0 0.0
    %285 = vmatprep.subr.mxu0 0.0
    %286 = vmatpush1.msra.mxu0 0.0
    %287 = vmatprep.subr.mxu0 0.0
    %288 = vmatpush1.msra.mxu0 0.0
    %289 = vmatprep.subr.mxu0 0.0
    %290 = vmatpush1.msra.mxu0 0.0
    %291 = vmatprep.subr.mxu0 0.0
    %292 = vmatpush1.msra.mxu0 0.0
    %293 = vmatprep.subr.mxu0 0.0
    %294 = vmatpush1.msra.mxu0 0.0
    %295 = vmatprep.subr.mxu0 0.0
    %296 = vmatpush1.msra.mxu0 0.0
    %297 = vmatprep.subr.mxu0 0.0
    %298 = vmatpush1.msra.mxu0 0.0
    %299 = vmatprep.subr.mxu0 0.0
    %300 = vmatpush1.msra.mxu0 0.0
    %301 = vmatprep.subr.mxu0 0.0
    %302 = vmatpush1.msra.mxu0 0.0
    %303 = vmatprep.subr.mxu0 0.0
    %304 = vmatpush1.msra.mxu0 0.0
    %305 = vmatprep.subr.mxu0 0.0
    %306 = vmatpush1.msra.mxu0 0.0
    %307 = vmatprep.subr.mxu0 0.0
    %308 = vmatpush1.msra.mxu0 0.0
    %309 = vmatprep.subr.mxu0 0.0
    %310 = vmatpush1.msra.mxu0 0.0
    %311 = vmatprep.subr.mxu0 0.0
    %312 = vmatpush1.msra.mxu0 0.0
    %313 = vmatprep.subr.mxu0 0.0
    %314 = vmatpush1.msra.mxu0 0.0
    %315 = vmatprep.subr.mxu0 0.0
    %316 = vmatpush1.msra.mxu0 0.0
    %317 = vmatprep.subr.mxu0 0.0
    %318 = vmatpush1.msra.mxu0 0.0
    %319 = vmatprep.subr.mxu0 0.0
    %320 = vmatpush1.msra.mxu0 0.0
    %321 = vmatprep.subr.mxu0 0.0
    %322 = vmatpush1.msra.mxu0 0.0
    %323 = vmatprep.subr.mxu0 0.0
    %324 = vmatpush1.msra.mxu0 0.0
    %325 = vmatprep.subr.mxu0 0.0
    %326 = vmatpush1.msra.mxu0 0.0
    %327 = vmatprep.subr.mxu0 0.0
    %328 = vmatpush1.msra.mxu0 0.0
    %329 = vmatprep.subr.mxu0 0.0
    %330 = vmatpush1.msra.mxu0 0.0
    %331 = vmatprep.subr.mxu0 0.0
    %332 = vmatpush1.msra.mxu0 0.0
    %333 = vmatprep.subr.mxu0 0.0
    %334 = vmatpush1.msra.mxu0 0.0
    %335 = vmatprep.mubr.f32.mxu0 0.0
    %336 = vmatmul.mubr.f32.gmra.mrb[0].mxu0 %v248
    %v337 = vpop.f32.mrb[0].mxu0
    %v338 = vadd.f32 0.0, %v337
    %v339 = vpop.f32.mrb[0].mxu0
    %340 = vmatprep.mubr.f32.mxu0 0.0
    %341 = vmatmul.mubr.f32.gmra.mrb[0].mxu0 %v251
    %v342 = vpop.f32.mrb[0].mxu0
    %v343 = vadd.f32 0.0, %v342
    %v344 = vpop.f32.mrb[0].mxu0
    %345 = vmatprep.mubr.f32.mxu0 0.0
    %346 = vmatmul.mubr.f32.gmra.mrb[0].mxu0 %v254
    %v347 = vpop.f32.mrb[0].mxu0
    %v348 = vadd.f32 0.0, %v347
    %v349 = vpop.f32.mrb[0].mxu0
    %350 = vmatprep.mubr.f32.mxu0 0.0
    %351 = vmatmul.mubr.f32.gmra.mrb[0].mxu0 %v257
    %v352 = vpop.f32.mrb[0].mxu0
    %v353 = vadd.f32 0.0, %v352
    %v354 = vpop.f32.mrb[0].mxu0
    %355 = vmatprep.mubr.f32.mxu0 0.0
    %356 = vmatmul.mubr.f32.gmra.mrb[0].mxu0 %v260
    %v357 = vpop.f32.mrb[0].mxu0
    %v358 = vadd.f32 0.0, %v357
    %v359 = vpop.f32.mrb[0].mxu0
    %360 = vmatprep.mubr.f32.mxu0 0.0
    %361 = vmatmul.mubr.f32.gmra.mrb[0].mxu0 %v263
    %v362 = vpop.f32.mrb[0].mxu0
    %v363 = vadd.f32 0.0, %v362
    %v364 = vpop.f32.mrb[0].mxu0
    %365 = vmatprep.mubr.f32.mxu0 0.0
    %366 = vmatmul.mubr.f32.gmra.mrb[0].mxu0 %v266
    %v367 = vpop.f32.mrb[0].mxu0
    %v368 = vadd.f32 0.0, %v367
    %v369 = vpop.f32.mrb[0].mxu0
    %370 = vmatprep.mubr.f32.mxu0 0.0
    %371 = vmatmul.mubr.f32.gmra.mrb[0].mxu0 %v269
    %v372 = vpop.f32.mrb[0].mxu0
    %v373 = vadd.f32 0.0, %v372
    %v374 = vpop.f32.mrb[0].mxu0
    %375 = vdwg.mxu0
    %v376 = vlaneseq
    %v377 = vshrl.u32 %v376, 7
    %v378 = vsub.s32 0, %v377
    %v379 = vrot.slane %v39, %v378
    %380 = vmatprep.subr.mxu0 0.0
    %381 = vmatpush1.msra.mxu0 %v338
    %382 = vmatprep.subr.mxu0 0.0
    %383 = vmatpush1.msra.mxu0 %v343
    %384 = vmatprep.subr.mxu0 0.0
    %385 = vmatpush1.msra.mxu0 %v348
    %386 = vmatprep.subr.mxu0 0.0
    %387 = vmatpush1.msra.mxu0 %v353
    %388 = vmatprep.subr.mxu0 0.0
    %389 = vmatpush1.msra.mxu0 %v358
    %390 = vmatprep.subr.mxu0 0.0
    %391 = vmatpush1.msra.mxu0 %v363
    %392 = vmatprep.subr.mxu0 0.0
    %393 = vmatpush1.msra.mxu0 %v368
    %394 = vmatprep.subr.mxu0 0.0
    %395 = vmatpush1.msra.mxu0 %v373
    %396 = vmatprep.subr.mxu0 0.0
    %397 = vmatpush1.msra.mxu0 0.0
    %398 = vmatprep.subr.mxu0 0.0
    %399 = vmatpush1.msra.mxu0 0.0
    %400 = vmatprep.subr.mxu0 0.0
    %401 = vmatpush1.msra.mxu0 0.0
    %402 = vmatprep.subr.mxu0 0.0
    %403 = vmatpush1.msra.mxu0 0.0
    %404 = vmatprep.subr.mxu0 0.0
    %405 = vmatpush1.msra.mxu0 0.0
    %406 = vmatprep.subr.mxu0 0.0
    %407 = vmatpush1.msra.mxu0 0.0
    %408 = vmatprep.subr.mxu0 0.0
    %409 = vmatpush1.msra.mxu0 0.0
    %410 = vmatprep.subr.mxu0 0.0
    %411 = vmatpush1.msra.mxu0 0.0
    %412 = vmatprep.subr.mxu0 0.0
    %413 = vmatpush1.msra.mxu0 0.0
    %414 = vmatprep.subr.mxu0 0.0
    %415 = vmatpush1.msra.mxu0 0.0
    %416 = vmatprep.subr.mxu0 0.0
    %417 = vmatpush1.msra.mxu0 0.0
    %418 = vmatprep.subr.mxu0 0.0
    %419 = vmatpush1.msra.mxu0 0.0
    %420 = vmatprep.subr.mxu0 0.0
    %421 = vmatpush1.msra.mxu0 0.0
    %422 = vmatprep.subr.mxu0 0.0
    %423 = vmatpush1.msra.mxu0 0.0
    %424 = vmatprep.subr.mxu0 0.0
    %425 = vmatpush1.msra.mxu0 0.0
    %426 = vmatprep.subr.mxu0 0.0
    %427 = vmatpush1.msra.mxu0 0.0
    %428 = vmatprep.subr.mxu0 0.0
    %429 = vmatpush1.msra.mxu0 0.0
    %430 = vmatprep.subr.mxu0 0.0
    %431 = vmatpush1.msra.mxu0 0.0
    %432 = vmatprep.subr.mxu0 0.0
    %433 = vmatpush1.msra.mxu0 0.0
    %434 = vmatprep.subr.mxu0 0.0
    %435 = vmatpush1.msra.mxu0 0.0
    %436 = vmatprep.subr.mxu0 0.0
    %437 = vmatpush1.msra.mxu0 0.0
    %438 = vmatprep.subr.mxu0 0.0
    %439 = vmatpush1.msra.mxu0 0.0
    %440 = vmatprep.subr.mxu0 0.0
    %441 = vmatpush1.msra.mxu0 0.0
    %442 = vmatprep.subr.mxu0 0.0
    %443 = vmatpush1.msra.mxu0 0.0
    %444 = vmatprep.mubr.f32.mxu0 0.0
    %445 = vmatmul.mubr.f32.gmra.mrb[0].mxu0 %v110
    %v446 = vpop.f32.mrb[0].mxu0
    %v447 = vadd.f32 %v379, %v446
    %v448 = vpop.f32.mrb[0].mxu0
    %449 = vmatprep.mubr.f32.mxu0 0.0
    %450 = vmatmul.mubr.f32.gmra.mrb[0].mxu0 %v113
    %v451 = vpop.f32.mrb[0].mxu0
    %v452 = vadd.f32 %v379, %v451
    %v453 = vpop.f32.mrb[0].mxu0
    %454 = vmatprep.mubr.f32.mxu0 0.0
    %455 = vmatmul.mubr.f32.gmra.mrb[0].mxu0 %v116
    %v456 = vpop.f32.mrb[0].mxu0
    %v457 = vadd.f32 %v379, %v456
    %v458 = vpop.f32.mrb[0].mxu0
    %459 = vmatprep.mubr.f32.mxu0 0.0
    %460 = vmatmul.mubr.f32.gmra.mrb[0].mxu0 %v119
    %v461 = vpop.f32.mrb[0].mxu0
    %v462 = vadd.f32 %v379, %v461
    %v463 = vpop.f32.mrb[0].mxu0
    %464 = vmatprep.mubr.f32.mxu0 0.0
    %465 = vmatmul.mubr.f32.gmra.mrb[0].mxu0 %v122
    %v466 = vpop.f32.mrb[0].mxu0
    %v467 = vadd.f32 %v379, %v466
    %v468 = vpop.f32.mrb[0].mxu0
    %469 = vmatprep.mubr.f32.mxu0 0.0
    %470 = vmatmul.mubr.f32.gmra.mrb[0].mxu0 %v125
    %v471 = vpop.f32.mrb[0].mxu0
    %v472 = vadd.f32 %v379, %v471
    %v473 = vpop.f32.mrb[0].mxu0
    %474 = vmatprep.mubr.f32.mxu0 0.0
    %475 = vmatmul.mubr.f32.gmra.mrb[0].mxu0 %v128
    %v476 = vpop.f32.mrb[0].mxu0
    %v477 = vadd.f32 %v379, %v476
    %v478 = vpop.f32.mrb[0].mxu0
    %479 = vmatprep.mubr.f32.mxu0 0.0
    %480 = vmatmul.mubr.f32.gmra.mrb[0].mxu0 %v131
    %v481 = vpop.f32.mrb[0].mxu0
    %v482 = vadd.f32 %v379, %v481
    %v483 = vpop.f32.mrb[0].mxu0
    %484 = vdwg.mxu0
    %485 = vst [vmem:[#allocation5] sm:$0xff] %v447
    %486 = vst [vmem:[#allocation5 + $0x8] sm:$0xff] %v452
    %487 = vst [vmem:[#allocation5 + $0x10] sm:$0xff] %v457
    %488 = vst [vmem:[#allocation5 + $0x18] sm:$0xff] %v462
    %489 = vst [vmem:[#allocation5 + $0x20] sm:$0xff] %v467
    %490 = vst [vmem:[#allocation5 + $0x28] sm:$0xff] %v472
    %491 = vst [vmem:[#allocation5 + $0x30] sm:$0xff] %v477
    %492 = vst [vmem:[#allocation5 + $0x38] sm:$0xff] %v482
    // Predicated region
    $region18: #{gcn_forward.1} parent=1 // pred_check
      _
    $region19: #{gcn_forward.1} parent=1 // pred_check_branch
      %494 = sbr.rel (0) target = $region21
    $region20: #{gcn_forward.1} parent=1 // pred_region
      %s496 = ssub.s32 1024, 1024
      %497 = vsyncadd [#allocation4], %s496
      %s498 = sshll.u32 [#allocation5], 4
      %s499 = int_to_ptr.vmem [resolvable:$true] %s498
      %504 = dma.vmem_to_hbm [thread:$0]  %s499, 1024, %s3, [#allocation4], 128, 128, 8
    $region21: #{gcn_forward.1} parent=1 // pred_fallthru
      _
    // Predicated region
    $region22: #{gcn_forward.1} parent=1 // pred_check
      _
    $region23: #{gcn_forward.1} parent=1 // pred_check_branch
      %506 = sbr.rel (0) target = $region25
    $region24: #{gcn_forward.1} parent=1 // pred_region
      %507 = dma.done [#allocation4], 1024
    $region25: #{gcn_forward.1} parent=1 // pred_fallthru
      _
    %508 = vsyncpa [#allocation3], 1
    %509 = vsyncpa [#allocation4], 1

</llo_original>
